<compile_context>
chip_gen: v5e
topology: v5e:2x2
jax: 0.10.0
libtpu: 0.0.40
codegen_flags: <defaults>
</compile_context>

<pallas_src>
import functools

import jax
import jax.numpy as jnp
import numpy as np
from jax.experimental import pallas as pl
from jax.experimental.pallas import tpu as pltpu


def _conv_pool_kernel(x_ref, w_ref, pooled_ref, state_ref, *, H, W, TH):
    """Grid = (batch, chunk).  3x3 conv (9 accumulating K=C matmuls) + global max.

    x_ref     : (Npad, C)  flattened zero-padded NHWC image, resident per batch.
                Npad = (H+3)*(W+2)  (1 pad row top, 2 bottom, 1 col left/right).
    w_ref     : (9, C, F)  conv weight, per-tap slices, resident across the grid.
    pooled_ref: (1, F)     per-batch max-pooled conv features (f32, no bias).
    state_ref : (TM, F)    f32 running elementwise max across chunks.
    """
    Wp = W + 2
    TM = TH * Wp
    m = pl.program_id(1)
    n_chunks = pl.num_programs(1)

    # Ragged last chunk: clamp the start row so it re-computes a few rows of
    # the previous chunk (harmless under a global max) instead of reading OOB.
    y0 = jnp.minimum(m * TH, H - TH)
    base = y0 * Wp

    # 3x3 conv as nine accumulating K=C MXU matmuls on sublane-shifted views
    # of the flat padded image (no im2col, no in-kernel reshapes).  Columns
    # x' in {W, W+1} of each output row are "extended-width" garbage (wrap
    # reads into the zero pad) and are excluded in the finalize reduce below.
    acc = None
    for ky in range(3):
        for kx in range(3):
            view = x_ref[pl.ds(base + ky * Wp + kx, TM), :]        # (TM, C)
            part = jnp.dot(view, w_ref[ky * 3 + kx],
                           preferred_element_type=jnp.float32)     # (TM, F) f32
            acc = part if acc is None else acc + part

    @pl.when(m == 0)
    def _():
        state_ref[...] = acc

    @pl.when(m > 0)
    def _():
        # Running max on the VPU; the full (H*W, F) conv output never exists.
        state_ref[...] = jnp.maximum(state_ref[...], acc)

    @pl.when(m == n_chunks - 1)
    def _():
        # Finalize: reduce only the W valid columns of each of the TH row
        # groups (static slices), skipping the 2 garbage columns per row.
        pooled = None
        for r in range(TH):
            seg = jnp.max(state_ref[pl.ds(r * Wp, W), :], axis=0, keepdims=True)
            pooled = seg if pooled is None else jnp.maximum(pooled, seg)
        pooled_ref[...] = pooled.astype(pooled_ref.dtype)


def _pick_th(H, W, tm_target):
    """Output rows per grid step; matmul rows TM = TH * (W + 2) ~ tm_target."""
    Wp = W + 2
    th = max(1, min(H, tm_target // Wp))
    # Mild preference for TM that is a multiple of 8 sublanes (clean layout),
    # without shrinking the tile by more than a few rows.
    for cand in range(th, max(1, th - 7) - 1, -1):
        if (cand * Wp) % 8 == 0:
            return cand
    return th


def pooled_conv_features(x_nchw, wconv_hwio, *, use_bf16=False, tm_target=256):
    """Conv2d(C, F, k=3, pad=1) + global max pool as one Pallas kernel.

    Returns (B, F) f32 pooled conv features WITHOUT the conv bias (the bias is
    per-channel, so it is folded into the FC bias by the callers below).
    tm_target: ~256 for v6e/v7x (256-row MXU), ~128 for v5e.
    """
    B, C, H, W = x_nchw.shape
    F = wconv_hwio.shape[-1]
    Wp = W + 2
    TH = _pick_th(H, W, tm_target)
    TM = TH * Wp
    n_chunks = pl.cdiv(H, TH)
    Npad = (H + 3) * Wp

    x = x_nchw
    w = wconv_hwio.reshape(9, C, F)                       # per-tap (ky*3+kx, C, F)
    if use_bf16:
        # bf16 MXU inputs are native on v5e/v6e/v7x; accumulation stays f32
        # in-kernel.  Cast first so the transpose/pad passes move half the bytes.
        x = x.astype(jnp.bfloat16)
        w = w.astype(jnp.bfloat16)

    # Layout plumbing (single XLA pass, ~1.1x the activation — NOT a 9x im2col):
    # NCHW -> NHWC, zero-pad (1 row top / 2 bottom / 1 col each side so the
    # flat sublane-shifted tap views never run past the buffer), flatten spatial.
    x = jnp.transpose(x, (0, 2, 3, 1))
    x = jnp.pad(x, ((0, 0), (1, 2), (1, 1), (0, 0)))
    x = x.reshape(B, Npad, C)

    # NOTE: at real VGG sizes (28x28x256) the resident padded image is ~0.5 MiB
    # (bf16) and the weight ~1.2 MiB — far under the scoped-VMEM default on all
    # generations, so no vmem_limit_bytes override is needed.
    # NOTE: at the demo C_in=4 the per-tap K=4 matmuls waste MXU K-dim / lanes;
    # real deployment shapes have C_in=256 (K=256 per tap), which is what this
    # kernel is sized for.
    kernel = functools.partial(_conv_pool_kernel, H=H, W=W, TH=TH)
    pooled = pl.pallas_call(
        kernel,
        out_shape=jax.ShapeDtypeStruct((B, 1, F), jnp.float32),
        grid=(B, n_chunks),
        in_specs=[
            pl.BlockSpec((None, Npad, C), lambda b, m: (b, 0, 0)),
            pl.BlockSpec((9, C, F), lambda b, m: (0, 0, 0)),
        ],
        out_specs=pl.BlockSpec((None, 1, F), lambda b, m: (b, 0, 0)),
        scratch_shapes=[pltpu.VMEM((TM, F), jnp.float32)],
        compiler_params=pltpu.CompilerParams(
            dimension_semantics=("parallel", "arbitrary")),
    )(x, w)
    return pooled[:, 0, :]                                # (B, F), lane-dense


def classifier_forward(x_nchw, wconv_hwio, bconv, wfc, bfc, *,
                       use_bf16=False, tm_target=256):
    """One Classifier head: conv3x3 -> dropout(eval=id) -> global max pool -> fc."""
    pooled = pooled_conv_features(x_nchw, wconv_hwio,
                                  use_bf16=use_bf16, tm_target=tm_target)
    # Conv bias folded into the FC bias (max(conv)+b == max(conv+b), b per-channel).
    bfc_eff = bconv @ wfc + bfc
    return pooled @ wfc + bfc_eff


def fused_heads_forward(feats, params, fusion_w, *, use_bf16=False, tm_target=256):
    """Three Classifier heads + weighted fusion; the three lane-sparse FCs and
    the weighted sum collapse into ONE XLA matmul on the concatenated pooled
    features."""
    pooled = [pooled_conv_features(x, p[0], use_bf16=use_bf16, tm_target=tm_target)
              for x, p in zip(feats, params)]              # each (B, F)
    big = jnp.concatenate(pooled, axis=-1)                 # (B, 3*F)
    wfc_stack = jnp.concatenate(
        [fusion_w[i] * params[i][2] for i in range(len(params))], axis=0)
    bias = sum(fusion_w[i] * (params[i][1] @ params[i][2] + params[i][3])
               for i in range(len(params)))
    return big @ wfc_stack + bias


def classifier_reference(x_nchw, wconv_hwio, bconv, wfc, bfc):
    """Pure-JAX reference (eval-mode dropout = identity)."""
    y = jax.lax.conv_general_dilated(
        x_nchw, wconv_hwio, window_strides=(1, 1), padding="SAME",
        dimension_numbers=("NCHW", "HWIO", "NCHW"))
    y = y + bconv[None, :, None, None]
    pooled = jnp.max(y, axis=(2, 3))                       # global max pool
    return pooled @ wfc + bfc


if __name__ == "__main__":
    B, C_IN = 2, 4
    F_OUT, NUM_CLASSES = 256, 10
    SPATIAL = (4, 8, 16)   # xsp / xsq / xsr pyramid levels (kept small)

    key = jax.random.PRNGKey(0)

    def make_head_params(k):
        kw, kb, kfw, kfb = jax.random.split(k, 4)
        wconv = jax.random.normal(kw, (3, 3, C_IN, F_OUT), jnp.float32) * 0.05
        bconv = jax.random.normal(kb, (F_OUT,), jnp.float32) * 0.05
        wfc = jax.random.normal(kfw, (F_OUT, NUM_CLASSES), jnp.float32) * 0.05
        bfc = jax.random.normal(kfb, (NUM_CLASSES,), jnp.float32) * 0.05
        return wconv, bconv, wfc, bfc

    key, k1, k2, k3 = jax.random.split(key, 4)
    params = [make_head_params(k) for k in (k1, k2, k3)]

    key, kx1, kx2, kx3 = jax.random.split(key, 4)
    feats = [jax.random.normal(k, (B, C_IN, s, s), jnp.float32)
             for k, s in zip((kx1, kx2, kx3), SPATIAL)]

    fusion_w = jnp.array([1.0, 1.0, 1.0], jnp.float32)     # w1, w2, w3

    # Pallas forward: three pooled-conv kernels + one fused FC/fusion matmul.
    final = fused_heads_forward(feats, params, fusion_w)
    final = jax.block_until_ready(final)

    # Pure-JAX reference.
    ref_scores = [classifier_reference(x, *p) for x, p in zip(feats, params)]
    ref_final = sum(w * s for w, s in zip(fusion_w, ref_scores))

    np.testing.assert_allclose(np.asarray(final), np.asarray(ref_final),
                               rtol=1e-4, atol=1e-4)
    assert final.shape == (B, NUM_CLASSES)

    # Single-head path (exercises the multi-chunk / ragged-clamp code on 16x16).
    out_f32 = classifier_forward(feats[-1], *params[-1])
    out_f32 = jax.block_until_ready(out_f32)
    np.testing.assert_allclose(np.asarray(out_f32), np.asarray(ref_scores[-1]),
                               rtol=1e-4, atol=1e-4)

    # bf16 MXU-input path (recommended on v5e/v6e/v7x); f32 accumulation in-kernel.
    out_bf16 = classifier_forward(feats[-1], *params[-1], use_bf16=True)
    out_bf16 = jax.block_until_ready(out_bf16)
    np.testing.assert_allclose(np.asarray(out_bf16), np.asarray(ref_scores[-1]),
                               rtol=2e-2, atol=2e-2)

    print("KERNEL_OK")
</pallas_src>

<mosaic_0001>
module attributes {stable_mosaic.version = 11 : i64} {
  func.func @_conv_pool_kernel(%arg0: i32, %arg1: i32, %arg2: memref<1x42x4xf32, #tpu.memory_space<vmem>>, %arg3: memref<9x4x256xf32, #tpu.memory_space<vmem>>, %arg4: memref<1x1x256xf32, #tpu.memory_space<vmem>>, %arg5: memref<24x256xf32, #tpu.memory_space<vmem>>) attributes {dimension_semantics = [#tpu.dimension_semantics<parallel>, #tpu.dimension_semantics<arbitrary>], iteration_bounds = array<i64: 2, 1>, scalar_prefetch = 0 : i64, scratch_operands = 1 : i64, tpu.core_type = #tpu.core_type<tc>, window_params = [{transform_indices = @transform_0, window_bounds = array<i64: 1, 42, 4>}, {pipeline_mode = #tpu.pipeline_mode<synchronous>, transform_indices = @transform_1, window_bounds = array<i64: 9, 4, 256>}, {transform_indices = @transform_2, window_bounds = array<i64: 1, 1, 256>}]} {
    %c4_i32 = arith.constant 4 : i32
    %0 = arith.muli %arg1, %c4_i32 : i32
    %c0_i32 = arith.constant 0 : i32
    %1 = arith.minsi %0, %c0_i32 : i32
    %c6_i32 = arith.constant 6 : i32
    %2 = arith.muli %1, %c6_i32 : i32
    %c0_i32_0 = arith.constant 0 : i32
    %3 = arith.addi %2, %c0_i32_0 : i32
    %c0_i32_1 = arith.constant 0 : i32
    %4 = arith.addi %3, %c0_i32_1 : i32
    %c0 = arith.constant 0 : index
    %5 = arith.index_cast %4 : i32 to index
    %c0_2 = arith.constant 0 : index
    %6 = vector.load %arg2[%c0, %5, %c0_2] : memref<1x42x4xf32, #tpu.memory_space<vmem>>, vector<1x24x4xf32>
    %7 = vector.shape_cast %6 : vector<1x24x4xf32> to vector<24x4xf32>
    %c0_3 = arith.constant 0 : index
    %c0_4 = arith.constant 0 : index
    %c0_5 = arith.constant 0 : index
    %8 = vector.load %arg3[%c0_3, %c0_4, %c0_5] : memref<9x4x256xf32, #tpu.memory_space<vmem>>, vector<1x4x256xf32>
    %9 = vector.shape_cast %8 : vector<1x4x256xf32> to vector<4x256xf32>
    %cst = arith.constant dense<0.000000e+00> : vector<24x256xf32>
    %10 = tpu.matmul %7, %9, %cst {dimension_numbers = #tpu.dot_dimension_numbers<[1], [0], [0], [1], [0, 0, 1, 1], [], []>} : vector<24x4xf32>, vector<4x256xf32>, vector<24x256xf32> -> vector<24x256xf32>
    %c0_i32_6 = arith.constant 0 : i32
    %11 = arith.addi %2, %c0_i32_6 : i32
    %c1_i32 = arith.constant 1 : i32
    %12 = arith.addi %11, %c1_i32 : i32
    %c0_7 = arith.constant 0 : index
    %13 = arith.index_cast %12 : i32 to index
    %c0_8 = arith.constant 0 : index
    %14 = vector.load %arg2[%c0_7, %13, %c0_8] : memref<1x42x4xf32, #tpu.memory_space<vmem>>, vector<1x24x4xf32>
    %15 = vector.shape_cast %14 : vector<1x24x4xf32> to vector<24x4xf32>
    %c1 = arith.constant 1 : index
    %c0_9 = arith.constant 0 : index
    %c0_10 = arith.constant 0 : index
    %16 = vector.load %arg3[%c1, %c0_9, %c0_10] : memref<9x4x256xf32, #tpu.memory_space<vmem>>, vector<1x4x256xf32>
    %17 = vector.shape_cast %16 : vector<1x4x256xf32> to vector<4x256xf32>
    %cst_11 = arith.constant dense<0.000000e+00> : vector<24x256xf32>
    %18 = tpu.matmul %15, %17, %cst_11 {dimension_numbers = #tpu.dot_dimension_numbers<[1], [0], [0], [1], [0, 0, 1, 1], [], []>} : vector<24x4xf32>, vector<4x256xf32>, vector<24x256xf32> -> vector<24x256xf32>
    %19 = arith.addf %10, %18 : vector<24x256xf32>
    %c0_i32_12 = arith.constant 0 : i32
    %20 = arith.addi %2, %c0_i32_12 : i32
    %c2_i32 = arith.constant 2 : i32
    %21 = arith.addi %20, %c2_i32 : i32
    %c0_13 = arith.constant 0 : index
    %22 = arith.index_cast %21 : i32 to index
    %c0_14 = arith.constant 0 : index
    %23 = vector.load %arg2[%c0_13, %22, %c0_14] : memref<1x42x4xf32, #tpu.memory_space<vmem>>, vector<1x24x4xf32>
    %24 = vector.shape_cast %23 : vector<1x24x4xf32> to vector<24x4xf32>
    %c2 = arith.constant 2 : index
    %c0_15 = arith.constant 0 : index
    %c0_16 = arith.constant 0 : index
    %25 = vector.load %arg3[%c2, %c0_15, %c0_16] : memref<9x4x256xf32, #tpu.memory_space<vmem>>, vector<1x4x256xf32>
    %26 = vector.shape_cast %25 : vector<1x4x256xf32> to vector<4x256xf32>
    %cst_17 = arith.constant dense<0.000000e+00> : vector<24x256xf32>
    %27 = tpu.matmul %24, %26, %cst_17 {dimension_numbers = #tpu.dot_dimension_numbers<[1], [0], [0], [1], [0, 0, 1, 1], [], []>} : vector<24x4xf32>, vector<4x256xf32>, vector<24x256xf32> -> vector<24x256xf32>
    %28 = arith.addf %19, %27 : vector<24x256xf32>
    %c6_i32_18 = arith.constant 6 : i32
    %29 = arith.addi %2, %c6_i32_18 : i32
    %c0_i32_19 = arith.constant 0 : i32
    %30 = arith.addi %29, %c0_i32_19 : i32
    %c0_20 = arith.constant 0 : index
    %31 = arith.index_cast %30 : i32 to index
    %c0_21 = arith.constant 0 : index
    %32 = vector.load %arg2[%c0_20, %31, %c0_21] : memref<1x42x4xf32, #tpu.memory_space<vmem>>, vector<1x24x4xf32>
    %33 = vector.shape_cast %32 : vector<1x24x4xf32> to vector<24x4xf32>
    %c3 = arith.constant 3 : index
    %c0_22 = arith.constant 0 : index
    %c0_23 = arith.constant 0 : index
    %34 = vector.load %arg3[%c3, %c0_22, %c0_23] : memref<9x4x256xf32, #tpu.memory_space<vmem>>, vector<1x4x256xf32>
    %35 = vector.shape_cast %34 : vector<1x4x256xf32> to vector<4x256xf32>
    %cst_24 = arith.constant dense<0.000000e+00> : vector<24x256xf32>
    %36 = tpu.matmul %33, %35, %cst_24 {dimension_numbers = #tpu.dot_dimension_numbers<[1], [0], [0], [1], [0, 0, 1, 1], [], []>} : vector<24x4xf32>, vector<4x256xf32>, vector<24x256xf32> -> vector<24x256xf32>
    %37 = arith.addf %28, %36 : vector<24x256xf32>
    %c6_i32_25 = arith.constant 6 : i32
    %38 = arith.addi %2, %c6_i32_25 : i32
    %c1_i32_26 = arith.constant 1 : i32
    %39 = arith.addi %38, %c1_i32_26 : i32
    %c0_27 = arith.constant 0 : index
    %40 = arith.index_cast %39 : i32 to index
    %c0_28 = arith.constant 0 : index
    %41 = vector.load %arg2[%c0_27, %40, %c0_28] : memref<1x42x4xf32, #tpu.memory_space<vmem>>, vector<1x24x4xf32>
    %42 = vector.shape_cast %41 : vector<1x24x4xf32> to vector<24x4xf32>
    %c4 = arith.constant 4 : index
    %c0_29 = arith.constant 0 : index
    %c0_30 = arith.constant 0 : index
    %43 = vector.load %arg3[%c4, %c0_29, %c0_30] : memref<9x4x256xf32, #tpu.memory_space<vmem>>, vector<1x4x256xf32>
    %44 = vector.shape_cast %43 : vector<1x4x256xf32> to vector<4x256xf32>
    %cst_31 = arith.constant dense<0.000000e+00> : vector<24x256xf32>
    %45 = tpu.matmul %42, %44, %cst_31 {dimension_numbers = #tpu.dot_dimension_numbers<[1], [0], [0], [1], [0, 0, 1, 1], [], []>} : vector<24x4xf32>, vector<4x256xf32>, vector<24x256xf32> -> vector<24x256xf32>
    %46 = arith.addf %37, %45 : vector<24x256xf32>
    %c6_i32_32 = arith.constant 6 : i32
    %47 = arith.addi %2, %c6_i32_32 : i32
    %c2_i32_33 = arith.constant 2 : i32
    %48 = arith.addi %47, %c2_i32_33 : i32
    %c0_34 = arith.constant 0 : index
    %49 = arith.index_cast %48 : i32 to index
    %c0_35 = arith.constant 0 : index
    %50 = vector.load %arg2[%c0_34, %49, %c0_35] : memref<1x42x4xf32, #tpu.memory_space<vmem>>, vector<1x24x4xf32>
    %51 = vector.shape_cast %50 : vector<1x24x4xf32> to vector<24x4xf32>
    %c5 = arith.constant 5 : index
    %c0_36 = arith.constant 0 : index
    %c0_37 = arith.constant 0 : index
    %52 = vector.load %arg3[%c5, %c0_36, %c0_37] : memref<9x4x256xf32, #tpu.memory_space<vmem>>, vector<1x4x256xf32>
    %53 = vector.shape_cast %52 : vector<1x4x256xf32> to vector<4x256xf32>
    %cst_38 = arith.constant dense<0.000000e+00> : vector<24x256xf32>
    %54 = tpu.matmul %51, %53, %cst_38 {dimension_numbers = #tpu.dot_dimension_numbers<[1], [0], [0], [1], [0, 0, 1, 1], [], []>} : vector<24x4xf32>, vector<4x256xf32>, vector<24x256xf32> -> vector<24x256xf32>
    %55 = arith.addf %46, %54 : vector<24x256xf32>
    %c12_i32 = arith.constant 12 : i32
    %56 = arith.addi %2, %c12_i32 : i32
    %c0_i32_39 = arith.constant 0 : i32
    %57 = arith.addi %56, %c0_i32_39 : i32
    %c0_40 = arith.constant 0 : index
    %58 = arith.index_cast %57 : i32 to index
    %c0_41 = arith.constant 0 : index
    %59 = vector.load %arg2[%c0_40, %58, %c0_41] : memref<1x42x4xf32, #tpu.memory_space<vmem>>, vector<1x24x4xf32>
    %60 = vector.shape_cast %59 : vector<1x24x4xf32> to vector<24x4xf32>
    %c6 = arith.constant 6 : index
    %c0_42 = arith.constant 0 : index
    %c0_43 = arith.constant 0 : index
    %61 = vector.load %arg3[%c6, %c0_42, %c0_43] : memref<9x4x256xf32, #tpu.memory_space<vmem>>, vector<1x4x256xf32>
    %62 = vector.shape_cast %61 : vector<1x4x256xf32> to vector<4x256xf32>
    %cst_44 = arith.constant dense<0.000000e+00> : vector<24x256xf32>
    %63 = tpu.matmul %60, %62, %cst_44 {dimension_numbers = #tpu.dot_dimension_numbers<[1], [0], [0], [1], [0, 0, 1, 1], [], []>} : vector<24x4xf32>, vector<4x256xf32>, vector<24x256xf32> -> vector<24x256xf32>
    %64 = arith.addf %55, %63 : vector<24x256xf32>
    %c12_i32_45 = arith.constant 12 : i32
    %65 = arith.addi %2, %c12_i32_45 : i32
    %c1_i32_46 = arith.constant 1 : i32
    %66 = arith.addi %65, %c1_i32_46 : i32
    %c0_47 = arith.constant 0 : index
    %67 = arith.index_cast %66 : i32 to index
    %c0_48 = arith.constant 0 : index
    %68 = vector.load %arg2[%c0_47, %67, %c0_48] : memref<1x42x4xf32, #tpu.memory_space<vmem>>, vector<1x24x4xf32>
    %69 = vector.shape_cast %68 : vector<1x24x4xf32> to vector<24x4xf32>
    %c7 = arith.constant 7 : index
    %c0_49 = arith.constant 0 : index
    %c0_50 = arith.constant 0 : index
    %70 = vector.load %arg3[%c7, %c0_49, %c0_50] : memref<9x4x256xf32, #tpu.memory_space<vmem>>, vector<1x4x256xf32>
    %71 = vector.shape_cast %70 : vector<1x4x256xf32> to vector<4x256xf32>
    %cst_51 = arith.constant dense<0.000000e+00> : vector<24x256xf32>
    %72 = tpu.matmul %69, %71, %cst_51 {dimension_numbers = #tpu.dot_dimension_numbers<[1], [0], [0], [1], [0, 0, 1, 1], [], []>} : vector<24x4xf32>, vector<4x256xf32>, vector<24x256xf32> -> vector<24x256xf32>
    %73 = arith.addf %64, %72 : vector<24x256xf32>
    %c12_i32_52 = arith.constant 12 : i32
    %74 = arith.addi %2, %c12_i32_52 : i32
    %c2_i32_53 = arith.constant 2 : i32
    %75 = arith.addi %74, %c2_i32_53 : i32
    %c0_54 = arith.constant 0 : index
    %76 = arith.index_cast %75 : i32 to index
    %c0_55 = arith.constant 0 : index
    %77 = vector.load %arg2[%c0_54, %76, %c0_55] : memref<1x42x4xf32, #tpu.memory_space<vmem>>, vector<1x24x4xf32>
    %78 = vector.shape_cast %77 : vector<1x24x4xf32> to vector<24x4xf32>
    %c8 = arith.constant 8 : index
    %c0_56 = arith.constant 0 : index
    %c0_57 = arith.constant 0 : index
    %79 = vector.load %arg3[%c8, %c0_56, %c0_57] : memref<9x4x256xf32, #tpu.memory_space<vmem>>, vector<1x4x256xf32>
    %80 = vector.shape_cast %79 : vector<1x4x256xf32> to vector<4x256xf32>
    %cst_58 = arith.constant dense<0.000000e+00> : vector<24x256xf32>
    %81 = tpu.matmul %78, %80, %cst_58 {dimension_numbers = #tpu.dot_dimension_numbers<[1], [0], [0], [1], [0, 0, 1, 1], [], []>} : vector<24x4xf32>, vector<4x256xf32>, vector<24x256xf32> -> vector<24x256xf32>
    %82 = arith.addf %73, %81 : vector<24x256xf32>
    %c0_i32_59 = arith.constant 0 : i32
    %83 = arith.cmpi eq, %arg1, %c0_i32_59 : i32
    %84 = arith.extui %83 : i1 to i32
    %c0_i32_60 = arith.constant 0 : i32
    %85 = arith.cmpi ne, %84, %c0_i32_60 : i32
    scf.if %85 {
      %c0_65 = arith.constant 0 : index
      %c0_66 = arith.constant 0 : index
      %92 = vector.load %arg5[%c0_65, %c0_66] : memref<24x256xf32, #tpu.memory_space<vmem>>, vector<24x256xf32>
      tpu.vector_store %arg5[%c0_65, %c0_66], %82 {strides = array<i32>} : memref<24x256xf32, #tpu.memory_space<vmem>>, vector<24x256xf32>,
    } else {
    }
    %c0_i32_61 = arith.constant 0 : i32
    %86 = arith.cmpi sgt, %arg1, %c0_i32_61 : i32
    %87 = arith.extui %86 : i1 to i32
    %c0_i32_62 = arith.constant 0 : i32
    %88 = arith.cmpi ne, %87, %c0_i32_62 : i32
    scf.if %88 {
      %c0_65 = arith.constant 0 : index
      %c0_66 = arith.constant 0 : index
      %92 = vector.load %arg5[%c0_65, %c0_66] : memref<24x256xf32, #tpu.memory_space<vmem>>, vector<24x256xf32>
      %93 = arith.maximumf %92, %82 : vector<24x256xf32>
      %c0_67 = arith.constant 0 : index
      %c0_68 = arith.constant 0 : index
      %94 = vector.load %arg5[%c0_67, %c0_68] : memref<24x256xf32, #tpu.memory_space<vmem>>, vector<24x256xf32>
      tpu.vector_store %arg5[%c0_67, %c0_68], %93 {strides = array<i32>} : memref<24x256xf32, #tpu.memory_space<vmem>>, vector<24x256xf32>,
    } else {
    }
    %c0_i32_63 = arith.constant 0 : i32
    %89 = arith.cmpi eq, %arg1, %c0_i32_63 : i32
    %90 = arith.extui %89 : i1 to i32
    %c0_i32_64 = arith.constant 0 : i32
    %91 = arith.cmpi ne, %90, %c0_i32_64 : i32
    scf.if %91 {
      %c0_65 = arith.constant 0 : index
      %c0_66 = arith.constant 0 : index
      %92 = vector.load %arg5[%c0_65, %c0_66] : memref<24x256xf32, #tpu.memory_space<vmem>>, vector<4x256xf32>
      %cst_67 = arith.constant dense<0xFF800000> : vector<256xf32>
      %93 = vector.multi_reduction <maximumf>, %92, %cst_67 [0] : vector<4x256xf32> to vector<256xf32>
      %94 = vector.shape_cast %93 : vector<256xf32> to vector<1x256xf32>
      %c6_68 = arith.constant 6 : index
      %c0_69 = arith.constant 0 : index
      %95 = vector.load %arg5[%c6_68, %c0_69] : memref<24x256xf32, #tpu.memory_space<vmem>>, vector<4x256xf32>
      %cst_70 = arith.constant dense<0xFF800000> : vector<256xf32>
      %96 = vector.multi_reduction <maximumf>, %95, %cst_70 [0] : vector<4x256xf32> to vector<256xf32>
      %97 = vector.shape_cast %96 : vector<256xf32> to vector<1x256xf32>
      %98 = arith.maximumf %94, %97 : vector<1x256xf32>
      %c12 = arith.constant 12 : index
      %c0_71 = arith.constant 0 : index
      %99 = vector.load %arg5[%c12, %c0_71] : memref<24x256xf32, #tpu.memory_space<vmem>>, vector<4x256xf32>
      %cst_72 = arith.constant dense<0xFF800000> : vector<256xf32>
      %100 = vector.multi_reduction <maximumf>, %99, %cst_72 [0] : vector<4x256xf32> to vector<256xf32>
      %101 = vector.shape_cast %100 : vector<256xf32> to vector<1x256xf32>
      %102 = arith.maximumf %98, %101 : vector<1x256xf32>
      %c18 = arith.constant 18 : index
      %c0_73 = arith.constant 0 : index
      %103 = vector.load %arg5[%c18, %c0_73] : memref<24x256xf32, #tpu.memory_space<vmem>>, vector<4x256xf32>
      %cst_74 = arith.constant dense<0xFF800000> : vector<256xf32>
      %104 = vector.multi_reduction <maximumf>, %103, %cst_74 [0] : vector<4x256xf32> to vector<256xf32>
      %105 = vector.shape_cast %104 : vector<256xf32> to vector<1x256xf32>
      %106 = arith.maximumf %102, %105 : vector<1x256xf32>
      %c0_75 = arith.constant 0 : index
      %c0_76 = arith.constant 0 : index
      %c0_77 = arith.constant 0 : index
      %107 = vector.load %arg4[%c0_75, %c0_76, %c0_77] : memref<1x1x256xf32, #tpu.memory_space<vmem>>, vector<1x1x256xf32>
      %108 = vector.shape_cast %107 : vector<1x1x256xf32> to vector<1x256xf32>
      %109 = vector.shape_cast %106 : vector<1x256xf32> to vector<1x1x256xf32>
      tpu.vector_store %arg4[%c0_75, %c0_76, %c0_77], %109 {strides = array<i32>} : memref<1x1x256xf32, #tpu.memory_space<vmem>>, vector<1x1x256xf32>,
    } else {
    }
    return
  }
  func.func @transform_0(%arg0: i32, %arg1: i32) -> (i32, i32, i32) {
    %c0_i32 = arith.constant 0 : i32
    %c0_i32_0 = arith.constant 0 : i32
    %c0_i32_1 = arith.constant 0 : i32
    return %arg0, %c0_i32, %c0_i32_0 : i32, i32, i32
  }
  func.func @transform_1(%arg0: i32, %arg1: i32) -> (i32, i32, i32) {
    %c0_i32 = arith.constant 0 : i32
    %c0_i32_0 = arith.constant 0 : i32
    %c0_i32_1 = arith.constant 0 : i32
    %c0_i32_2 = arith.constant 0 : i32
    return %c0_i32, %c0_i32_0, %c0_i32_1 : i32, i32, i32
  }
  func.func @transform_2(%arg0: i32, %arg1: i32) -> (i32, i32, i32) {
    %c0_i32 = arith.constant 0 : i32
    %c0_i32_0 = arith.constant 0 : i32
    %c0_i32_1 = arith.constant 0 : i32
    return %arg0, %c0_i32, %c0_i32_0 : i32, i32, i32
  }
}

</mosaic_0001>

<llo_original>
// kernel: tpu_custom_call.1
$region0: #{tpu_custom_call.1}
  #allocation0 [shape = 'u32[]', space=smem, size = 0x4, offset = 0x4, fixed_abs, tag = 'smem constant byte address 0x4 - core index']
  #allocation1 [shape = 'u32[72,128]{1,0:T(1,128)}', space=vmem, size = 0x9000, scoped, tag = 'internal scratch']
  #allocation2 [shape = 'f32[24,256]{1,0:T(8,128)}', space=vmem, size = 0x6000, scoped, tag = 'scratch operand']
  %s0 = inlined_call_operand.vmem [shape: f32[2,42,4], index: 0, kind: input, shape index: {}]
  %s1 = inlined_call_operand.vmem [shape: f32[9,4,256], index: 1, kind: input, shape index: {}]
  %s2 = inlined_call_operand.hbm [shape: f32[2,1,256], index: 2, kind: output, shape index: {}]
  %s3 = sld [smem:[#allocation0]]
  $region53: #{tpu_custom_call.1} parent=0
    _
  %s5 = ssub.s32 1, %s3
  %s6 = scalar_select 0, %s5, %s3
  $region1: #{tpu_custom_call.1} parent=0
    #allocation3 [shape = 'u8[2048]{0}', space=vmem, size = 0x800, scoped, tag = 'output window, operand 0']
    #allocation4 [shape = 's32[2]{0}', space=sflag, size = 0x8, scoped, tag = 'scoped memory for tpu_custom_call.1']
    %7 = vsyncpa [#allocation4], 0
    %s8 = scalar_lea.sflag [#allocation4], 1
    %9 = vsyncpa %s8, 0
    loop: start=0, step=1, limit=4
    $region2: #{tpu_custom_call.1} parent=1 // loop_pre_header
      _
    $region3: #{tpu_custom_call.1} parent=1 // loop_header
      %s11 = sphi 0, %s15
      %p12 = scmp.ge.s32.totalorder %s11, 4
      %s18 = sphi 0, %s30
      %s19 = sphi 0, %s26
      %s20 = sphi 0, %s18
      %s21 = sphi 0, %s19
      %s22 = sphi 0, %s20
      %s23 = sphi 0, %s21
      %s33 = sphi 0, %s35
      %s36 = sphi 0, %s33
      %s37 = sphi 0, %s36
      %s53 = sphi 0, %s37
      %s57 = sphi 0, %s57
      %s59 = sphi 0, %s57
      %s60 = sphi 0, %s59
      %s74 = sphi 0, %s60
      %s80 = sphi 0, %s82
      %s83 = sphi 0, %s80
      %s84 = sphi 0, %s83
      %s100 = sphi 0, %s84
    $region4: #{tpu_custom_call.1} parent=1 // loop_header_branch
      %14 = sbr.rel (%p12) target = $region8
    $region5: #{tpu_custom_call.1} parent=1 // loop_body
      %s16 = ssub.s32 %s11, 1
      %s17 = ssub.s32 %s11, 2
      %s24 = sadd.s32 1, %s19
      %p25 = scmp.ge.s32.totalorder %s24, 1
      %s26 = scalar_select %p25, 0, %s24
      %s27 = sadd.s32 1, %s18
      %s28 = scalar_select %p25, %s27, %s18
      %p29 = scmp.ge.s32.totalorder %s28, 2
      %s30 = scalar_select %p29, 0, %s28
      %s31 = ssub.s32 %s18, %s30
      %p32 = scmp.eq.s32.totalorder %s31, 0
      %s34 = sadd.s32 %s33, 1
      %s35 = scalar_select %p32, %s33, %s34
      %p38 = pneg %p32
      %p39 = scmp.eq.s32.totalorder %s11, 1
      %p40 = por %p38, %p39
      %p41 = scmp.ne.s32.totalorder %s33, %s36
      %p42 = scmp.eq.s32.totalorder %s11, 0
      %p43 = por %p41, %p42
      %p44 = scmp.ne.s32.totalorder %s33, %s36
      %p45 = scmp.eq.s32.totalorder %s16, 1
      %p46 = por %p44, %p45
      %p47 = scmp.ne.s32.totalorder %s36, %s37
      %p48 = scmp.eq.s32.totalorder %s16, 0
      %p49 = por %p47, %p48
      %p50 = scmp.ne.s32.totalorder %s36, %s37
      %p51 = scmp.eq.s32.totalorder %s17, 1
      %p52 = por %p50, %p51
      %p54 = scmp.ne.s32.totalorder %s37, %s53
      %p55 = scmp.eq.s32.totalorder %s17, 0
      %p56 = por %p54, %p55
      %s58 = sadd.s32 %s57, 1
      %p61 = scmp.eq.s32.totalorder %s11, 1
      %p62 = scmp.ne.s32.totalorder %s57, %s59
      %p63 = scmp.eq.s32.totalorder %s11, 0
      %p64 = por %p62, %p63
      %p65 = scmp.ne.s32.totalorder %s57, %s59
      %p66 = scmp.eq.s32.totalorder %s16, 1
      %p67 = por %p65, %p66
      %p68 = scmp.ne.s32.totalorder %s59, %s60
      %p69 = scmp.eq.s32.totalorder %s16, 0
      %p70 = por %p68, %p69
      %p71 = scmp.ne.s32.totalorder %s59, %s60
      %p72 = scmp.eq.s32.totalorder %s17, 1
      %p73 = por %p71, %p72
      %p75 = scmp.ne.s32.totalorder %s60, %s74
      %p76 = scmp.eq.s32.totalorder %s17, 0
      %p77 = por %p75, %p76
      %s78 = ssub.s32 %s18, %s30
      %p79 = scmp.eq.s32.totalorder %s78, 0
      %s81 = sadd.s32 %s80, 1
      %s82 = scalar_select %p79, %s80, %s81
      %p85 = pneg %p79
      %p86 = scmp.eq.s32.totalorder %s11, 1
      %p87 = por %p85, %p86
      %p88 = scmp.ne.s32.totalorder %s80, %s83
      %p89 = scmp.eq.s32.totalorder %s11, 0
      %p90 = por %p88, %p89
      %p91 = scmp.ne.s32.totalorder %s80, %s83
      %p92 = scmp.eq.s32.totalorder %s16, 1
      %p93 = por %p91, %p92
      %p94 = scmp.ne.s32.totalorder %s83, %s84
      %p95 = scmp.eq.s32.totalorder %s16, 0
      %p96 = por %p94, %p95
      %p97 = scmp.ne.s32.totalorder %s83, %s84
      %p98 = scmp.eq.s32.totalorder %s17, 1
      %p99 = por %p97, %p98
      %p101 = scmp.ne.s32.totalorder %s84, %s100
      %p102 = scmp.eq.s32.totalorder %s17, 0
      %p103 = por %p101, %p102
      %p104 = scmp.le.s32.totalorder 1, %s11
      %p105 = scmp.lt.s32.totalorder %s11, 3
      %p106 = pnand %p104, %p105
      %p107 = pneg %p106
      // Predicated region
      $region9: #{tpu_custom_call.1} parent=5 // pred_check
        _
      $region10: #{tpu_custom_call.1} parent=5 // pred_check_branch
        %109 = sbr.rel (%p106) target = $region12
      $region11: #{tpu_custom_call.1} parent=5 // pred_region
        %s110 = ssub.s32 %s11, 1
        // Predicated region
        $region13: #{tpu_custom_call.1} parent=11 // pred_check
          %p111 = pneg %p70
        $region14: #{tpu_custom_call.1} parent=11 // pred_check_branch
          %113 = sbr.rel (%p111) target = $region16
        $region15: #{tpu_custom_call.1} parent=11 // pred_region
          _
        $region16: #{tpu_custom_call.1} parent=11 // pred_fallthru
          _
      $region12: #{tpu_custom_call.1} parent=5 // pred_fallthru
        _
      %p114 = scmp.lt.s32.totalorder %s11, 2
      // Predicated region
      $region17: #{tpu_custom_call.1} parent=5 // pred_check
        %p115 = pneg %p114
      $region18: #{tpu_custom_call.1} parent=5 // pred_check_branch
        %117 = sbr.rel (%p115) target = $region20
      $region19: #{tpu_custom_call.1} parent=5 // pred_region
        // Predicated region
        $region21: #{tpu_custom_call.1} parent=19 // pred_check
          %p118 = pneg %p43
        $region22: #{tpu_custom_call.1} parent=19 // pred_check_branch
          %120 = sbr.rel (%p118) target = $region24
        $region23: #{tpu_custom_call.1} parent=19 // pred_region
          %p121 = scmp.lt.s32.totalorder %s18, 1
          %s122 = scalar_select %p121, %s18, 1
          %s123 = smul.addr %s122, 6
          %s124 = smul.addr %s123, 8
          %s125 = scalar_lea.vmem %s0, %s124
        $region24: #{tpu_custom_call.1} parent=19 // pred_fallthru
          _
      $region20: #{tpu_custom_call.1} parent=5 // pred_fallthru
        _
      %p126 = scmp.le.s32.totalorder 1, %s11
      %p127 = scmp.lt.s32.totalorder %s11, 3
      %p128 = pnand %p126, %p127
      %p129 = pneg %p128
      // Predicated region
      $region25: #{tpu_custom_call.1} parent=5 // pred_check
        _
      $region26: #{tpu_custom_call.1} parent=5 // pred_check_branch
        %131 = sbr.rel (%p128) target = $region28
      $region27: #{tpu_custom_call.1} parent=5 // pred_region
        %s132 = ssub.s32 %s11, 1
        %p133 = scmp.lt.s32.totalorder %s20, 1
        %s134 = scalar_select %p133, %s20, 1
        %s135 = smul.addr %s134, 6
        %s136 = smul.addr %s135, 8
        %s137 = scalar_lea.vmem %s0, %s136
        %p138 = pneg %p49
        %p139 = pneg %p46
        %p140 = pneg %p70
        %p141 = pneg %p67
        %p142 = pneg %p96
        %p143 = pneg %p93
        %s144 = sand.u32 %s83, 1
        %s145 = scalar_lea.sflag [#allocation4], %s144
        %s146 = sand.u32 %s83, 1
        %s147 = smul.addr %s146, 2
        %s148 = scalar_lea.vmem [#allocation3], %s147
        %p149 = scmp.lt.s32.totalorder %s20, 1
        %s150 = scalar_select %p149, %s20, 1
        %s151 = smul.addr %s150, 6
        %s152 = smul.addr %s151, 8
        %s153 = scalar_lea.vmem %s0, %s152
        %s154 = smul.u32 %s21, 4
        %p155 = scmp.lt.s32.totalorder %s154, 0
        %s156 = scalar_select %p155, %s154, 0
        %s157 = smul.u32 %s156, 6
        %s158 = scalar_lea.vmem %s153, %s157
        %v159 = vld [vmem:[%s158] sm:$0xff]
        %v160 = vld [vmem:[%s158 + $0x8] sm:$0xff]
        %v161 = vld [vmem:[%s158 + $0x10] sm:$0xff]
        %v162 = vld [vmem:[%s1] sm:$0xff]
        %s163 = sadd.s32 %s157, 1
        %s164 = scalar_lea.vmem %s153, %s163
        %v165 = vld [vmem:[%s164] sm:$0xff]
        %v166 = vld [vmem:[%s164 + $0x8] sm:$0xff]
        %v167 = vld [vmem:[%s164 + $0x10] sm:$0xff]
        %s168 = scalar_lea.vmem %s1, 8
        %v169 = vld [vmem:[%s168] sm:$0xff]
        %171 = vst [vmem:[#allocation1] ss:$2 sm:$0xff] %v169
        %v172 = vld.sshfl [vmem:[#allocation1] sm:$0xff pattern:$0x75316420]
        %v173 = vld.sshfl [vmem:[#allocation1 + $0x8] sm:$0xff pattern:$0x75316420]
        %vm174 = vcmask 31744
        %v176 = vsel %vm174, %v165, 0
        %v179 = vsel %vm174, %v166, 0
        %v182 = vsel %vm174, %v167, 0
        %vm184 = vcmask 1043456
        %v185 = vsel %vm184, %v172, 0
        %v187 = vsel %vm184, %v173, 0
        %189 = vmatpush.msra.mxu0 0.0
        %190 = vmatpush.msra.mxu0 0.0
        %191 = vmatpush.msra.mxu0 0.0
        %192 = vmatpush.msra.mxu0 0.0
        %193 = vmatpush.msra.mxu0 0.0
        %194 = vmatpush.msra.mxu0 0.0
        %195 = vmatpush.msra.mxu0 0.0
        %196 = vmatpush.msra.mxu0 0.0
        %197 = vmatpush.msra.mxu0 0.0
        %198 = vmatpush.msra.mxu0 0.0
        %199 = vmatpush.msra.mxu0 0.0
        %200 = vmatpush.msra.mxu0 0.0
        %201 = vmatpush.msra.mxu0 0.0
        %202 = vmatpush.msra.mxu0 0.0
        %203 = vmatpush.msra.mxu0 0.0
        %204 = vmatpush.msra.mxu0 %v185
        %205 = vmatmul.f32.gmra.mxu0 %v176
        %v206 = vpop.f32.mrf.mxu0
        %v207 = vadd.f32 0.0, %v206
        %208 = vmatmul.f32.gmra.mxu0 %v179
        %v209 = vpop.f32.mrf.mxu0
        %v210 = vadd.f32 0.0, %v209
        %211 = vmatmul.f32.gmra.mxu0 %v182
        %v212 = vpop.f32.mrf.mxu0
        %v213 = vadd.f32 0.0, %v212
        %214 = vdwg.mxu0
        %215 = vmatpush.msra.mxu0 0.0
        %216 = vmatpush.msra.mxu0 0.0
        %217 = vmatpush.msra.mxu0 0.0
        %218 = vmatpush.msra.mxu0 0.0
        %219 = vmatpush.msra.mxu0 0.0
        %220 = vmatpush.msra.mxu0 0.0
        %221 = vmatpush.msra.mxu0 0.0
        %222 = vmatpush.msra.mxu0 0.0
        %223 = vmatpush.msra.mxu0 0.0
        %224 = vmatpush.msra.mxu0 0.0
        %225 = vmatpush.msra.mxu0 0.0
        %226 = vmatpush.msra.mxu0 0.0
        %227 = vmatpush.msra.mxu0 0.0
        %228 = vmatpush.msra.mxu0 0.0
        %229 = vmatpush.msra.mxu0 0.0
        %230 = vmatpush.msra.mxu0 %v187
        %231 = vmatmul.f32.gmra.mxu0 %v176
        %v232 = vpop.f32.mrf.mxu0
        %v233 = vadd.f32 0.0, %v232
        %234 = vmatmul.f32.gmra.mxu0 %v179
        %v235 = vpop.f32.mrf.mxu0
        %v236 = vadd.f32 0.0, %v235
        %237 = vmatmul.f32.gmra.mxu0 %v182
        %v238 = vpop.f32.mrf.mxu0
        %v239 = vadd.f32 0.0, %v238
        %240 = vdwg.mxu0
        %242 = vst [vmem:[#allocation1] ss:$2 sm:$0xff] %v162
        %v243 = vld.sshfl [vmem:[#allocation1] sm:$0xff pattern:$0x75316420]
        %v244 = vld.sshfl [vmem:[#allocation1 + $0x8] sm:$0xff pattern:$0x75316420]
        %v246 = vsel %vm174, %v159, 0
        %v249 = vsel %vm174, %v160, 0
        %v252 = vsel %vm174, %v161, 0
        %v254 = vsel %vm184, %v243, 0
        %v256 = vsel %vm184, %v244, 0
        %258 = vmatpush.msra.mxu0 0.0
        %259 = vmatpush.msra.mxu0 0.0
        %260 = vmatpush.msra.mxu0 0.0
        %261 = vmatpush.msra.mxu0 0.0
        %262 = vmatpush.msra.mxu0 0.0
        %263 = vmatpush.msra.mxu0 0.0
        %264 = vmatpush.msra.mxu0 0.0
        %265 = vmatpush.msra.mxu0 0.0
        %266 = vmatpush.msra.mxu0 0.0
        %267 = vmatpush.msra.mxu0 0.0
        %268 = vmatpush.msra.mxu0 0.0
        %269 = vmatpush.msra.mxu0 0.0
        %270 = vmatpush.msra.mxu0 0.0
        %271 = vmatpush.msra.mxu0 0.0
        %272 = vmatpush.msra.mxu0 0.0
        %273 = vmatpush.msra.mxu0 %v254
        %274 = vmatmul.f32.gmra.mxu0 %v246
        %v275 = vpop.f32.mrf.mxu0
        %v276 = vadd.f32 %v207, %v275
        %277 = vmatmul.f32.gmra.mxu0 %v249
        %v278 = vpop.f32.mrf.mxu0
        %v279 = vadd.f32 %v210, %v278
        %280 = vmatmul.f32.gmra.mxu0 %v252
        %v281 = vpop.f32.mrf.mxu0
        %v282 = vadd.f32 %v213, %v281
        %283 = vdwg.mxu0
        %284 = vmatpush.msra.mxu0 0.0
        %285 = vmatpush.msra.mxu0 0.0
        %286 = vmatpush.msra.mxu0 0.0
        %287 = vmatpush.msra.mxu0 0.0
        %288 = vmatpush.msra.mxu0 0.0
        %289 = vmatpush.msra.mxu0 0.0
        %290 = vmatpush.msra.mxu0 0.0
        %291 = vmatpush.msra.mxu0 0.0
        %292 = vmatpush.msra.mxu0 0.0
        %293 = vmatpush.msra.mxu0 0.0
        %294 = vmatpush.msra.mxu0 0.0
        %295 = vmatpush.msra.mxu0 0.0
        %296 = vmatpush.msra.mxu0 0.0
        %297 = vmatpush.msra.mxu0 0.0
        %298 = vmatpush.msra.mxu0 0.0
        %299 = vmatpush.msra.mxu0 %v256
        %300 = vmatmul.f32.gmra.mxu0 %v246
        %v301 = vpop.f32.mrf.mxu0
        %v302 = vadd.f32 %v233, %v301
        %303 = vmatmul.f32.gmra.mxu0 %v249
        %v304 = vpop.f32.mrf.mxu0
        %v305 = vadd.f32 %v236, %v304
        %306 = vmatmul.f32.gmra.mxu0 %v252
        %v307 = vpop.f32.mrf.mxu0
        %v308 = vadd.f32 %v239, %v307
        %309 = vdwg.mxu0
        %s310 = sadd.s32 %s157, 2
        %s311 = scalar_lea.vmem %s153, %s310
        %v312 = vld [vmem:[%s311] sm:$0xff]
        %v313 = vld [vmem:[%s311 + $0x8] sm:$0xff]
        %v314 = vld [vmem:[%s311 + $0x10] sm:$0xff]
        %s315 = scalar_lea.vmem %s1, 16
        %v316 = vld [vmem:[%s315] sm:$0xff]
        %318 = vst [vmem:[#allocation1] ss:$2 sm:$0xff] %v316
        %v319 = vld.sshfl [vmem:[#allocation1] sm:$0xff pattern:$0x75316420]
        %v320 = vld.sshfl [vmem:[#allocation1 + $0x8] sm:$0xff pattern:$0x75316420]
        %v322 = vsel %vm174, %v312, 0
        %v325 = vsel %vm174, %v313, 0
        %v328 = vsel %vm174, %v314, 0
        %v330 = vsel %vm184, %v319, 0
        %v332 = vsel %vm184, %v320, 0
        %334 = vmatpush.msra.mxu0 0.0
        %335 = vmatpush.msra.mxu0 0.0
        %336 = vmatpush.msra.mxu0 0.0
        %337 = vmatpush.msra.mxu0 0.0
        %338 = vmatpush.msra.mxu0 0.0
        %339 = vmatpush.msra.mxu0 0.0
        %340 = vmatpush.msra.mxu0 0.0
        %341 = vmatpush.msra.mxu0 0.0
        %342 = vmatpush.msra.mxu0 0.0
        %343 = vmatpush.msra.mxu0 0.0
        %344 = vmatpush.msra.mxu0 0.0
        %345 = vmatpush.msra.mxu0 0.0
        %346 = vmatpush.msra.mxu0 0.0
        %347 = vmatpush.msra.mxu0 0.0
        %348 = vmatpush.msra.mxu0 0.0
        %349 = vmatpush.msra.mxu0 %v330
        %350 = vmatmul.f32.gmra.mxu0 %v322
        %v351 = vpop.f32.mrf.mxu0
        %v352 = vadd.f32 0.0, %v351
        %353 = vmatmul.f32.gmra.mxu0 %v325
        %v354 = vpop.f32.mrf.mxu0
        %v355 = vadd.f32 0.0, %v354
        %356 = vmatmul.f32.gmra.mxu0 %v328
        %v357 = vpop.f32.mrf.mxu0
        %v358 = vadd.f32 0.0, %v357
        %359 = vdwg.mxu0
        %360 = vmatpush.msra.mxu0 0.0
        %361 = vmatpush.msra.mxu0 0.0
        %362 = vmatpush.msra.mxu0 0.0
        %363 = vmatpush.msra.mxu0 0.0
        %364 = vmatpush.msra.mxu0 0.0
        %365 = vmatpush.msra.mxu0 0.0
        %366 = vmatpush.msra.mxu0 0.0
        %367 = vmatpush.msra.mxu0 0.0
        %368 = vmatpush.msra.mxu0 0.0
        %369 = vmatpush.msra.mxu0 0.0
        %370 = vmatpush.msra.mxu0 0.0
        %371 = vmatpush.msra.mxu0 0.0
        %372 = vmatpush.msra.mxu0 0.0
        %373 = vmatpush.msra.mxu0 0.0
        %374 = vmatpush.msra.mxu0 0.0
        %375 = vmatpush.msra.mxu0 %v332
        %376 = vmatmul.f32.gmra.mxu0 %v322
        %v377 = vpop.f32.mrf.mxu0
        %v378 = vadd.f32 0.0, %v377
        %379 = vmatmul.f32.gmra.mxu0 %v325
        %v380 = vpop.f32.mrf.mxu0
        %v381 = vadd.f32 0.0, %v380
        %382 = vmatmul.f32.gmra.mxu0 %v328
        %v383 = vpop.f32.mrf.mxu0
        %v384 = vadd.f32 0.0, %v383
        %385 = vdwg.mxu0
        %v386 = vadd.f32 %v276, %v352
        %v387 = vadd.f32 %v302, %v378
        %v388 = vadd.f32 %v279, %v355
        %v389 = vadd.f32 %v305, %v381
        %v390 = vadd.f32 %v282, %v358
        %v391 = vadd.f32 %v308, %v384
        %s392 = sadd.s32 %s157, 6
        %s393 = scalar_lea.vmem %s153, %s392
        %v394 = vld [vmem:[%s393] sm:$0xff]
        %v395 = vld [vmem:[%s393 + $0x8] sm:$0xff]
        %v396 = vld [vmem:[%s393 + $0x10] sm:$0xff]
        %s397 = scalar_lea.vmem %s1, 24
        %v398 = vld [vmem:[%s397] sm:$0xff]
        %400 = vst [vmem:[#allocation1] ss:$2 sm:$0xff] %v398
        %v401 = vld.sshfl [vmem:[#allocation1] sm:$0xff pattern:$0x75316420]
        %v402 = vld.sshfl [vmem:[#allocation1 + $0x8] sm:$0xff pattern:$0x75316420]
        %v404 = vsel %vm174, %v394, 0
        %v407 = vsel %vm174, %v395, 0
        %v410 = vsel %vm174, %v396, 0
        %v412 = vsel %vm184, %v401, 0
        %v414 = vsel %vm184, %v402, 0
        %416 = vmatpush.msra.mxu0 0.0
        %417 = vmatpush.msra.mxu0 0.0
        %418 = vmatpush.msra.mxu0 0.0
        %419 = vmatpush.msra.mxu0 0.0
        %420 = vmatpush.msra.mxu0 0.0
        %421 = vmatpush.msra.mxu0 0.0
        %422 = vmatpush.msra.mxu0 0.0
        %423 = vmatpush.msra.mxu0 0.0
        %424 = vmatpush.msra.mxu0 0.0
        %425 = vmatpush.msra.mxu0 0.0
        %426 = vmatpush.msra.mxu0 0.0
        %427 = vmatpush.msra.mxu0 0.0
        %428 = vmatpush.msra.mxu0 0.0
        %429 = vmatpush.msra.mxu0 0.0
        %430 = vmatpush.msra.mxu0 0.0
        %431 = vmatpush.msra.mxu0 %v412
        %432 = vmatmul.f32.gmra.mxu0 %v404
        %v433 = vpop.f32.mrf.mxu0
        %v434 = vadd.f32 0.0, %v433
        %435 = vmatmul.f32.gmra.mxu0 %v407
        %v436 = vpop.f32.mrf.mxu0
        %v437 = vadd.f32 0.0, %v436
        %438 = vmatmul.f32.gmra.mxu0 %v410
        %v439 = vpop.f32.mrf.mxu0
        %v440 = vadd.f32 0.0, %v439
        %441 = vdwg.mxu0
        %442 = vmatpush.msra.mxu0 0.0
        %443 = vmatpush.msra.mxu0 0.0
        %444 = vmatpush.msra.mxu0 0.0
        %445 = vmatpush.msra.mxu0 0.0
        %446 = vmatpush.msra.mxu0 0.0
        %447 = vmatpush.msra.mxu0 0.0
        %448 = vmatpush.msra.mxu0 0.0
        %449 = vmatpush.msra.mxu0 0.0
        %450 = vmatpush.msra.mxu0 0.0
        %451 = vmatpush.msra.mxu0 0.0
        %452 = vmatpush.msra.mxu0 0.0
        %453 = vmatpush.msra.mxu0 0.0
        %454 = vmatpush.msra.mxu0 0.0
        %455 = vmatpush.msra.mxu0 0.0
        %456 = vmatpush.msra.mxu0 0.0
        %457 = vmatpush.msra.mxu0 %v414
        %458 = vmatmul.f32.gmra.mxu0 %v404
        %v459 = vpop.f32.mrf.mxu0
        %v460 = vadd.f32 0.0, %v459
        %461 = vmatmul.f32.gmra.mxu0 %v407
        %v462 = vpop.f32.mrf.mxu0
        %v463 = vadd.f32 0.0, %v462
        %464 = vmatmul.f32.gmra.mxu0 %v410
        %v465 = vpop.f32.mrf.mxu0
        %v466 = vadd.f32 0.0, %v465
        %467 = vdwg.mxu0
        %v468 = vadd.f32 %v386, %v434
        %v469 = vadd.f32 %v387, %v460
        %v470 = vadd.f32 %v388, %v437
        %v471 = vadd.f32 %v389, %v463
        %v472 = vadd.f32 %v390, %v440
        %v473 = vadd.f32 %v391, %v466
        %s474 = sadd.s32 %s157, 7
        %s475 = scalar_lea.vmem %s153, %s474
        %v476 = vld [vmem:[%s475] sm:$0xff]
        %v477 = vld [vmem:[%s475 + $0x8] sm:$0xff]
        %v478 = vld [vmem:[%s475 + $0x10] sm:$0xff]
        %s479 = scalar_lea.vmem %s1, 32
        %v480 = vld [vmem:[%s479] sm:$0xff]
        %482 = vst [vmem:[#allocation1] ss:$2 sm:$0xff] %v480
        %v483 = vld.sshfl [vmem:[#allocation1] sm:$0xff pattern:$0x75316420]
        %v484 = vld.sshfl [vmem:[#allocation1 + $0x8] sm:$0xff pattern:$0x75316420]
        %v486 = vsel %vm174, %v476, 0
        %v489 = vsel %vm174, %v477, 0
        %v492 = vsel %vm174, %v478, 0
        %v494 = vsel %vm184, %v483, 0
        %v496 = vsel %vm184, %v484, 0
        %498 = vmatpush.msra.mxu0 0.0
        %499 = vmatpush.msra.mxu0 0.0
        %500 = vmatpush.msra.mxu0 0.0
        %501 = vmatpush.msra.mxu0 0.0
        %502 = vmatpush.msra.mxu0 0.0
        %503 = vmatpush.msra.mxu0 0.0
        %504 = vmatpush.msra.mxu0 0.0
        %505 = vmatpush.msra.mxu0 0.0
        %506 = vmatpush.msra.mxu0 0.0
        %507 = vmatpush.msra.mxu0 0.0
        %508 = vmatpush.msra.mxu0 0.0
        %509 = vmatpush.msra.mxu0 0.0
        %510 = vmatpush.msra.mxu0 0.0
        %511 = vmatpush.msra.mxu0 0.0
        %512 = vmatpush.msra.mxu0 0.0
        %513 = vmatpush.msra.mxu0 %v494
        %514 = vmatmul.f32.gmra.mxu0 %v486
        %v515 = vpop.f32.mrf.mxu0
        %v516 = vadd.f32 0.0, %v515
        %517 = vmatmul.f32.gmra.mxu0 %v489
        %v518 = vpop.f32.mrf.mxu0
        %v519 = vadd.f32 0.0, %v518
        %520 = vmatmul.f32.gmra.mxu0 %v492
        %v521 = vpop.f32.mrf.mxu0
        %v522 = vadd.f32 0.0, %v521
        %523 = vdwg.mxu0
        %524 = vmatpush.msra.mxu0 0.0
        %525 = vmatpush.msra.mxu0 0.0
        %526 = vmatpush.msra.mxu0 0.0
        %527 = vmatpush.msra.mxu0 0.0
        %528 = vmatpush.msra.mxu0 0.0
        %529 = vmatpush.msra.mxu0 0.0
        %530 = vmatpush.msra.mxu0 0.0
        %531 = vmatpush.msra.mxu0 0.0
        %532 = vmatpush.msra.mxu0 0.0
        %533 = vmatpush.msra.mxu0 0.0
        %534 = vmatpush.msra.mxu0 0.0
        %535 = vmatpush.msra.mxu0 0.0
        %536 = vmatpush.msra.mxu0 0.0
        %537 = vmatpush.msra.mxu0 0.0
        %538 = vmatpush.msra.mxu0 0.0
        %539 = vmatpush.msra.mxu0 %v496
        %540 = vmatmul.f32.gmra.mxu0 %v486
        %v541 = vpop.f32.mrf.mxu0
        %v542 = vadd.f32 0.0, %v541
        %543 = vmatmul.f32.gmra.mxu0 %v489
        %v544 = vpop.f32.mrf.mxu0
        %v545 = vadd.f32 0.0, %v544
        %546 = vmatmul.f32.gmra.mxu0 %v492
        %v547 = vpop.f32.mrf.mxu0
        %v548 = vadd.f32 0.0, %v547
        %549 = vdwg.mxu0
        %v550 = vadd.f32 %v468, %v516
        %v551 = vadd.f32 %v469, %v542
        %v552 = vadd.f32 %v470, %v519
        %v553 = vadd.f32 %v471, %v545
        %v554 = vadd.f32 %v472, %v522
        %v555 = vadd.f32 %v473, %v548
        %s556 = sadd.s32 %s157, 8
        %s557 = scalar_lea.vmem %s153, %s556
        %v558 = vld [vmem:[%s557] sm:$0xff]
        %v559 = vld [vmem:[%s557 + $0x8] sm:$0xff]
        %v560 = vld [vmem:[%s557 + $0x10] sm:$0xff]
        %s561 = scalar_lea.vmem %s1, 40
        %v562 = vld [vmem:[%s561] sm:$0xff]
        %564 = vst [vmem:[#allocation1] ss:$2 sm:$0xff] %v562
        %v565 = vld.sshfl [vmem:[#allocation1] sm:$0xff pattern:$0x75316420]
        %v566 = vld.sshfl [vmem:[#allocation1 + $0x8] sm:$0xff pattern:$0x75316420]
        %v568 = vsel %vm174, %v558, 0
        %v571 = vsel %vm174, %v559, 0
        %v574 = vsel %vm174, %v560, 0
        %v576 = vsel %vm184, %v565, 0
        %v578 = vsel %vm184, %v566, 0
        %580 = vmatpush.msra.mxu0 0.0
        %581 = vmatpush.msra.mxu0 0.0
        %582 = vmatpush.msra.mxu0 0.0
        %583 = vmatpush.msra.mxu0 0.0
        %584 = vmatpush.msra.mxu0 0.0
        %585 = vmatpush.msra.mxu0 0.0
        %586 = vmatpush.msra.mxu0 0.0
        %587 = vmatpush.msra.mxu0 0.0
        %588 = vmatpush.msra.mxu0 0.0
        %589 = vmatpush.msra.mxu0 0.0
        %590 = vmatpush.msra.mxu0 0.0
        %591 = vmatpush.msra.mxu0 0.0
        %592 = vmatpush.msra.mxu0 0.0
        %593 = vmatpush.msra.mxu0 0.0
        %594 = vmatpush.msra.mxu0 0.0
        %595 = vmatpush.msra.mxu0 %v576
        %596 = vmatmul.f32.gmra.mxu0 %v568
        %v597 = vpop.f32.mrf.mxu0
        %v598 = vadd.f32 0.0, %v597
        %599 = vmatmul.f32.gmra.mxu0 %v571
        %v600 = vpop.f32.mrf.mxu0
        %v601 = vadd.f32 0.0, %v600
        %602 = vmatmul.f32.gmra.mxu0 %v574
        %v603 = vpop.f32.mrf.mxu0
        %v604 = vadd.f32 0.0, %v603
        %605 = vdwg.mxu0
        %606 = vmatpush.msra.mxu0 0.0
        %607 = vmatpush.msra.mxu0 0.0
        %608 = vmatpush.msra.mxu0 0.0
        %609 = vmatpush.msra.mxu0 0.0
        %610 = vmatpush.msra.mxu0 0.0
        %611 = vmatpush.msra.mxu0 0.0
        %612 = vmatpush.msra.mxu0 0.0
        %613 = vmatpush.msra.mxu0 0.0
        %614 = vmatpush.msra.mxu0 0.0
        %615 = vmatpush.msra.mxu0 0.0
        %616 = vmatpush.msra.mxu0 0.0
        %617 = vmatpush.msra.mxu0 0.0
        %618 = vmatpush.msra.mxu0 0.0
        %619 = vmatpush.msra.mxu0 0.0
        %620 = vmatpush.msra.mxu0 0.0
        %621 = vmatpush.msra.mxu0 %v578
        %622 = vmatmul.f32.gmra.mxu0 %v568
        %v623 = vpop.f32.mrf.mxu0
        %v624 = vadd.f32 0.0, %v623
        %625 = vmatmul.f32.gmra.mxu0 %v571
        %v626 = vpop.f32.mrf.mxu0
        %v627 = vadd.f32 0.0, %v626
        %628 = vmatmul.f32.gmra.mxu0 %v574
        %v629 = vpop.f32.mrf.mxu0
        %v630 = vadd.f32 0.0, %v629
        %631 = vdwg.mxu0
        %v632 = vadd.f32 %v550, %v598
        %v633 = vadd.f32 %v551, %v624
        %v634 = vadd.f32 %v552, %v601
        %v635 = vadd.f32 %v553, %v627
        %v636 = vadd.f32 %v554, %v604
        %v637 = vadd.f32 %v555, %v630
        %s638 = sadd.s32 %s157, 12
        %s639 = scalar_lea.vmem %s153, %s638
        %v640 = vld [vmem:[%s639] sm:$0xff]
        %v641 = vld [vmem:[%s639 + $0x8] sm:$0xff]
        %v642 = vld [vmem:[%s639 + $0x10] sm:$0xff]
        %s643 = scalar_lea.vmem %s1, 48
        %v644 = vld [vmem:[%s643] sm:$0xff]
        %646 = vst [vmem:[#allocation1] ss:$2 sm:$0xff] %v644
        %v647 = vld.sshfl [vmem:[#allocation1] sm:$0xff pattern:$0x75316420]
        %v648 = vld.sshfl [vmem:[#allocation1 + $0x8] sm:$0xff pattern:$0x75316420]
        %v650 = vsel %vm174, %v640, 0
        %v653 = vsel %vm174, %v641, 0
        %v656 = vsel %vm174, %v642, 0
        %v658 = vsel %vm184, %v647, 0
        %v660 = vsel %vm184, %v648, 0
        %662 = vmatpush.msra.mxu0 0.0
        %663 = vmatpush.msra.mxu0 0.0
        %664 = vmatpush.msra.mxu0 0.0
        %665 = vmatpush.msra.mxu0 0.0
        %666 = vmatpush.msra.mxu0 0.0
        %667 = vmatpush.msra.mxu0 0.0
        %668 = vmatpush.msra.mxu0 0.0
        %669 = vmatpush.msra.mxu0 0.0
        %670 = vmatpush.msra.mxu0 0.0
        %671 = vmatpush.msra.mxu0 0.0
        %672 = vmatpush.msra.mxu0 0.0
        %673 = vmatpush.msra.mxu0 0.0
        %674 = vmatpush.msra.mxu0 0.0
        %675 = vmatpush.msra.mxu0 0.0
        %676 = vmatpush.msra.mxu0 0.0
        %677 = vmatpush.msra.mxu0 %v658
        %678 = vmatmul.f32.gmra.mxu0 %v650
        %v679 = vpop.f32.mrf.mxu0
        %v680 = vadd.f32 0.0, %v679
        %681 = vmatmul.f32.gmra.mxu0 %v653
        %v682 = vpop.f32.mrf.mxu0
        %v683 = vadd.f32 0.0, %v682
        %684 = vmatmul.f32.gmra.mxu0 %v656
        %v685 = vpop.f32.mrf.mxu0
        %v686 = vadd.f32 0.0, %v685
        %687 = vdwg.mxu0
        %688 = vmatpush.msra.mxu0 0.0
        %689 = vmatpush.msra.mxu0 0.0
        %690 = vmatpush.msra.mxu0 0.0
        %691 = vmatpush.msra.mxu0 0.0
        %692 = vmatpush.msra.mxu0 0.0
        %693 = vmatpush.msra.mxu0 0.0
        %694 = vmatpush.msra.mxu0 0.0
        %695 = vmatpush.msra.mxu0 0.0
        %696 = vmatpush.msra.mxu0 0.0
        %697 = vmatpush.msra.mxu0 0.0
        %698 = vmatpush.msra.mxu0 0.0
        %699 = vmatpush.msra.mxu0 0.0
        %700 = vmatpush.msra.mxu0 0.0
        %701 = vmatpush.msra.mxu0 0.0
        %702 = vmatpush.msra.mxu0 0.0
        %703 = vmatpush.msra.mxu0 %v660
        %704 = vmatmul.f32.gmra.mxu0 %v650
        %v705 = vpop.f32.mrf.mxu0
        %v706 = vadd.f32 0.0, %v705
        %707 = vmatmul.f32.gmra.mxu0 %v653
        %v708 = vpop.f32.mrf.mxu0
        %v709 = vadd.f32 0.0, %v708
        %710 = vmatmul.f32.gmra.mxu0 %v656
        %v711 = vpop.f32.mrf.mxu0
        %v712 = vadd.f32 0.0, %v711
        %713 = vdwg.mxu0
        %v714 = vadd.f32 %v632, %v680
        %v715 = vadd.f32 %v633, %v706
        %v716 = vadd.f32 %v634, %v683
        %v717 = vadd.f32 %v635, %v709
        %v718 = vadd.f32 %v636, %v686
        %v719 = vadd.f32 %v637, %v712
        %s720 = sadd.s32 %s157, 13
        %s721 = scalar_lea.vmem %s153, %s720
        %v722 = vld [vmem:[%s721] sm:$0xff]
        %v723 = vld [vmem:[%s721 + $0x8] sm:$0xff]
        %v724 = vld [vmem:[%s721 + $0x10] sm:$0xff]
        %s725 = scalar_lea.vmem %s1, 56
        %v726 = vld [vmem:[%s725] sm:$0xff]
        %728 = vst [vmem:[#allocation1] ss:$2 sm:$0xff] %v726
        %v729 = vld.sshfl [vmem:[#allocation1] sm:$0xff pattern:$0x75316420]
        %v730 = vld.sshfl [vmem:[#allocation1 + $0x8] sm:$0xff pattern:$0x75316420]
        %v732 = vsel %vm174, %v722, 0
        %v735 = vsel %vm174, %v723, 0
        %v738 = vsel %vm174, %v724, 0
        %v740 = vsel %vm184, %v729, 0
        %v742 = vsel %vm184, %v730, 0
        %744 = vmatpush.msra.mxu0 0.0
        %745 = vmatpush.msra.mxu0 0.0
        %746 = vmatpush.msra.mxu0 0.0
        %747 = vmatpush.msra.mxu0 0.0
        %748 = vmatpush.msra.mxu0 0.0
        %749 = vmatpush.msra.mxu0 0.0
        %750 = vmatpush.msra.mxu0 0.0
        %751 = vmatpush.msra.mxu0 0.0
        %752 = vmatpush.msra.mxu0 0.0
        %753 = vmatpush.msra.mxu0 0.0
        %754 = vmatpush.msra.mxu0 0.0
        %755 = vmatpush.msra.mxu0 0.0
        %756 = vmatpush.msra.mxu0 0.0
        %757 = vmatpush.msra.mxu0 0.0
        %758 = vmatpush.msra.mxu0 0.0
        %759 = vmatpush.msra.mxu0 %v740
        %760 = vmatmul.f32.gmra.mxu0 %v732
        %v761 = vpop.f32.mrf.mxu0
        %v762 = vadd.f32 0.0, %v761
        %763 = vmatmul.f32.gmra.mxu0 %v735
        %v764 = vpop.f32.mrf.mxu0
        %v765 = vadd.f32 0.0, %v764
        %766 = vmatmul.f32.gmra.mxu0 %v738
        %v767 = vpop.f32.mrf.mxu0
        %v768 = vadd.f32 0.0, %v767
        %769 = vdwg.mxu0
        %770 = vmatpush.msra.mxu0 0.0
        %771 = vmatpush.msra.mxu0 0.0
        %772 = vmatpush.msra.mxu0 0.0
        %773 = vmatpush.msra.mxu0 0.0
        %774 = vmatpush.msra.mxu0 0.0
        %775 = vmatpush.msra.mxu0 0.0
        %776 = vmatpush.msra.mxu0 0.0
        %777 = vmatpush.msra.mxu0 0.0
        %778 = vmatpush.msra.mxu0 0.0
        %779 = vmatpush.msra.mxu0 0.0
        %780 = vmatpush.msra.mxu0 0.0
        %781 = vmatpush.msra.mxu0 0.0
        %782 = vmatpush.msra.mxu0 0.0
        %783 = vmatpush.msra.mxu0 0.0
        %784 = vmatpush.msra.mxu0 0.0
        %785 = vmatpush.msra.mxu0 %v742
        %786 = vmatmul.f32.gmra.mxu0 %v732
        %v787 = vpop.f32.mrf.mxu0
        %v788 = vadd.f32 0.0, %v787
        %789 = vmatmul.f32.gmra.mxu0 %v735
        %v790 = vpop.f32.mrf.mxu0
        %v791 = vadd.f32 0.0, %v790
        %792 = vmatmul.f32.gmra.mxu0 %v738
        %v793 = vpop.f32.mrf.mxu0
        %v794 = vadd.f32 0.0, %v793
        %795 = vdwg.mxu0
        %v796 = vadd.f32 %v714, %v762
        %v797 = vadd.f32 %v715, %v788
        %v798 = vadd.f32 %v716, %v765
        %v799 = vadd.f32 %v717, %v791
        %v800 = vadd.f32 %v718, %v768
        %v801 = vadd.f32 %v719, %v794
        %s802 = sadd.s32 %s157, 14
        %s803 = scalar_lea.vmem %s153, %s802
        %v804 = vld [vmem:[%s803] sm:$0xff]
        %v805 = vld [vmem:[%s803 + $0x8] sm:$0xff]
        %v806 = vld [vmem:[%s803 + $0x10] sm:$0xff]
        %s807 = scalar_lea.vmem %s1, 64
        %v808 = vld [vmem:[%s807] sm:$0xff]
        %810 = vst [vmem:[#allocation1] ss:$2 sm:$0xff] %v808
        %v811 = vld.sshfl [vmem:[#allocation1] sm:$0xff pattern:$0x75316420]
        %v812 = vld.sshfl [vmem:[#allocation1 + $0x8] sm:$0xff pattern:$0x75316420]
        %v814 = vsel %vm174, %v804, 0
        %v817 = vsel %vm174, %v805, 0
        %v820 = vsel %vm174, %v806, 0
        %v822 = vsel %vm184, %v811, 0
        %v824 = vsel %vm184, %v812, 0
        %826 = vmatpush.msra.mxu0 0.0
        %827 = vmatpush.msra.mxu0 0.0
        %828 = vmatpush.msra.mxu0 0.0
        %829 = vmatpush.msra.mxu0 0.0
        %830 = vmatpush.msra.mxu0 0.0
        %831 = vmatpush.msra.mxu0 0.0
        %832 = vmatpush.msra.mxu0 0.0
        %833 = vmatpush.msra.mxu0 0.0
        %834 = vmatpush.msra.mxu0 0.0
        %835 = vmatpush.msra.mxu0 0.0
        %836 = vmatpush.msra.mxu0 0.0
        %837 = vmatpush.msra.mxu0 0.0
        %838 = vmatpush.msra.mxu0 0.0
        %839 = vmatpush.msra.mxu0 0.0
        %840 = vmatpush.msra.mxu0 0.0
        %841 = vmatpush.msra.mxu0 %v822
        %842 = vmatmul.f32.gmra.mxu0 %v814
        %v843 = vpop.f32.mrf.mxu0
        %v844 = vadd.f32 0.0, %v843
        %845 = vmatmul.f32.gmra.mxu0 %v817
        %v846 = vpop.f32.mrf.mxu0
        %v847 = vadd.f32 0.0, %v846
        %848 = vmatmul.f32.gmra.mxu0 %v820
        %v849 = vpop.f32.mrf.mxu0
        %v850 = vadd.f32 0.0, %v849
        %851 = vdwg.mxu0
        %852 = vmatpush.msra.mxu0 0.0
        %853 = vmatpush.msra.mxu0 0.0
        %854 = vmatpush.msra.mxu0 0.0
        %855 = vmatpush.msra.mxu0 0.0
        %856 = vmatpush.msra.mxu0 0.0
        %857 = vmatpush.msra.mxu0 0.0
        %858 = vmatpush.msra.mxu0 0.0
        %859 = vmatpush.msra.mxu0 0.0
        %860 = vmatpush.msra.mxu0 0.0
        %861 = vmatpush.msra.mxu0 0.0
        %862 = vmatpush.msra.mxu0 0.0
        %863 = vmatpush.msra.mxu0 0.0
        %864 = vmatpush.msra.mxu0 0.0
        %865 = vmatpush.msra.mxu0 0.0
        %866 = vmatpush.msra.mxu0 0.0
        %867 = vmatpush.msra.mxu0 %v824
        %868 = vmatmul.f32.gmra.mxu0 %v814
        %v869 = vpop.f32.mrf.mxu0
        %v870 = vadd.f32 0.0, %v869
        %871 = vmatmul.f32.gmra.mxu0 %v817
        %v872 = vpop.f32.mrf.mxu0
        %v873 = vadd.f32 0.0, %v872
        %874 = vmatmul.f32.gmra.mxu0 %v820
        %v875 = vpop.f32.mrf.mxu0
        %v876 = vadd.f32 0.0, %v875
        %877 = vdwg.mxu0
        %v878 = vadd.f32 %v796, %v844
        %v879 = vadd.f32 %v797, %v870
        %v880 = vadd.f32 %v798, %v847
        %v881 = vadd.f32 %v799, %v873
        %v882 = vadd.f32 %v800, %v850
        %v883 = vadd.f32 %v801, %v876
        %p884 = scmp.eq.s32.totalorder %s21, 0
        // Predicated region
        $region29: #{tpu_custom_call.1} parent=27 // pred_check
          %p885 = pneg %p884
        $region30: #{tpu_custom_call.1} parent=27 // pred_check_branch
          %887 = sbr.rel (%p885) target = $region32
        $region31: #{tpu_custom_call.1} parent=27 // pred_region
          %888 = vst [vmem:[#allocation2] sm:$0xff] %v878
          %889 = vst [vmem:[#allocation2 + $0x8] sm:$0xff] %v879
          %890 = vst [vmem:[#allocation2 + $0x10] sm:$0xff] %v880
          %891 = vst [vmem:[#allocation2 + $0x18] sm:$0xff] %v881
          %892 = vst [vmem:[#allocation2 + $0x20] sm:$0xff] %v882
          %893 = vst [vmem:[#allocation2 + $0x28] sm:$0xff] %v883
        $region32: #{tpu_custom_call.1} parent=27 // pred_fallthru
          _
        %p894 = scmp.gt.s32.totalorder %s21, 0
        // Predicated region
        $region33: #{tpu_custom_call.1} parent=27 // pred_check
          %p895 = pneg %p894
        $region34: #{tpu_custom_call.1} parent=27 // pred_check_branch
          %897 = sbr.rel (%p895) target = $region36
        $region35: #{tpu_custom_call.1} parent=27 // pred_region
          %v898 = vld [vmem:[#allocation2] sm:$0xff]
          %v899 = vld [vmem:[#allocation2 + $0x8] sm:$0xff]
          %v900 = vld [vmem:[#allocation2 + $0x10] sm:$0xff]
          %v901 = vld [vmem:[#allocation2 + $0x18] sm:$0xff]
          %v902 = vld [vmem:[#allocation2 + $0x20] sm:$0xff]
          %v903 = vld [vmem:[#allocation2 + $0x28] sm:$0xff]
          %v904 = vmax.f32 %v898, %v878
          %v905 = vmax.f32 %v899, %v879
          %v906 = vmax.f32 %v900, %v880
          %v907 = vmax.f32 %v901, %v881
          %v908 = vmax.f32 %v902, %v882
          %v909 = vmax.f32 %v903, %v883
          %910 = vst [vmem:[#allocation2] sm:$0xff] %v904
          %911 = vst [vmem:[#allocation2 + $0x8] sm:$0xff] %v905
          %912 = vst [vmem:[#allocation2 + $0x10] sm:$0xff] %v906
          %913 = vst [vmem:[#allocation2 + $0x18] sm:$0xff] %v907
          %914 = vst [vmem:[#allocation2 + $0x20] sm:$0xff] %v908
          %915 = vst [vmem:[#allocation2 + $0x28] sm:$0xff] %v909
        $region36: #{tpu_custom_call.1} parent=27 // pred_fallthru
          _
        // Predicated region
        $region37: #{tpu_custom_call.1} parent=27 // pred_check
          %p916 = pneg %p884
        $region38: #{tpu_custom_call.1} parent=27 // pred_check_branch
          %918 = sbr.rel (%p916) target = $region40
        $region39: #{tpu_custom_call.1} parent=27 // pred_region
          %v919 = vld [vmem:[#allocation2] sm:$0xf]
          %v920 = vld [vmem:[#allocation2 + $0x8] sm:$0xf]
          %v921 = vsel %vm184, %v919, -inf
          %v922 = vrot.slane %v921, 4
          %v923 = vmax.f32 %v921, %v922
          %v924 = vrot.slane %v923, 2
          %v925 = vmax.f32 %v923, %v924
          %v926 = vrot.slane %v925, 1
          %v927 = vmax.f32 %v925, %v926
          %v928 = vsel %vm184, %v920, -inf
          %v929 = vrot.slane %v928, 4
          %v930 = vmax.f32 %v928, %v929
          %v931 = vrot.slane %v930, 2
          %v932 = vmax.f32 %v930, %v931
          %v933 = vrot.slane %v932, 1
          %v934 = vmax.f32 %v932, %v933
          %v935 = vld [vmem:[#allocation2] sm:$0xc0]
          %v936 = vld [vmem:[#allocation2 + $0x8] sm:$0xc0]
          %v937 = vld [vmem:[#allocation2 + $0x10] sm:$0x3]
          %v938 = vld [vmem:[#allocation2 + $0x18] sm:$0x3]
          %vm939 = vcmask 1047558
          %v940 = vsel %vm939, %v935, -inf
          %vm941 = vcmask 1041408
          %v942 = vsel %vm941, %v937, -inf
          %v943 = vmax.f32 %v940, %v942
          %v944 = vrot.slane %v943, 4
          %v945 = vmax.f32 %v943, %v944
          %v946 = vrot.slane %v945, 2
          %v947 = vmax.f32 %v945, %v946
          %v948 = vrot.slane %v947, 1
          %v949 = vmax.f32 %v947, %v948
          %v950 = vsel %vm939, %v936, -inf
          %v951 = vsel %vm941, %v938, -inf
          %v952 = vmax.f32 %v950, %v951
          %v953 = vrot.slane %v952, 4
          %v954 = vmax.f32 %v952, %v953
          %v955 = vrot.slane %v954, 2
          %v956 = vmax.f32 %v954, %v955
          %v957 = vrot.slane %v956, 1
          %v958 = vmax.f32 %v956, %v957
          %v959 = vmax.f32 %v927, %v949
          %v960 = vmax.f32 %v934, %v958
          %v961 = vld [vmem:[#allocation2 + $0x10] sm:$0xf0]
          %v962 = vld [vmem:[#allocation2 + $0x18] sm:$0xf0]
          %vm963 = vcmask 1047556
          %v964 = vsel %vm963, %v961, -inf
          %v965 = vrot.slane %v964, 4
          %v966 = vmax.f32 %v964, %v965
          %v967 = vrot.slane %v966, 2
          %v968 = vmax.f32 %v966, %v967
          %v969 = vrot.slane %v968, 1
          %v970 = vmax.f32 %v968, %v969
          %v971 = vsel %vm963, %v962, -inf
          %v972 = vrot.slane %v971, 4
          %v973 = vmax.f32 %v971, %v972
          %v974 = vrot.slane %v973, 2
          %v975 = vmax.f32 %v973, %v974
          %v976 = vrot.slane %v975, 1
          %v977 = vmax.f32 %v975, %v976
          %v978 = vmax.f32 %v959, %v970
          %v979 = vmax.f32 %v960, %v977
          %v980 = vld [vmem:[#allocation2 + $0x20] sm:$0x3c]
          %v981 = vld [vmem:[#allocation2 + $0x28] sm:$0x3c]
          %vm982 = vcmask 1045506
          %v983 = vsel %vm982, %v980, -inf
          %v984 = vrot.slane %v983, 4
          %v985 = vmax.f32 %v983, %v984
          %v986 = vrot.slane %v985, 2
          %v987 = vmax.f32 %v985, %v986
          %v988 = vrot.slane %v987, 1
          %v989 = vmax.f32 %v987, %v988
          %v990 = vsel %vm982, %v981, -inf
          %v991 = vrot.slane %v990, 4
          %v992 = vmax.f32 %v990, %v991
          %v993 = vrot.slane %v992, 2
          %v994 = vmax.f32 %v992, %v993
          %v995 = vrot.slane %v994, 1
          %v996 = vmax.f32 %v994, %v995
          %v997 = vmax.f32 %v978, %v989
          %v998 = vmax.f32 %v979, %v996
          %v1001 = vrot.slane %v998, 7
          %vm1002 = vcmask 1040384
          %v1003 = vsel %vm1002, %v997, %v1001
          %v1005 = vlaneseq
          %vm1006 = vcmp.ge.s32.totalorder %v1005, 0
          %vm1007 = vcmp.lt.s32.totalorder %v1005, 256
          %vm1008 = vmand %vm1006, %vm1007
          %1009 = vst.msk [vmem:[%s148] sm:$0x3] %vm1008, %v1003
        $region40: #{tpu_custom_call.1} parent=27 // pred_fallthru
          _
        %s1010 = sand.u32 %s83, 1
        %s1011 = scalar_lea.sflag [#allocation4], %s1010
        %s1012 = sand.u32 %s83, 1
        %s1013 = smul.addr %s1012, 2
        %s1014 = scalar_lea.vmem [#allocation3], %s1013
        // Predicated region
        $region41: #{tpu_custom_call.1} parent=27 // pred_check
          %p1015 = pneg %p93
        $region42: #{tpu_custom_call.1} parent=27 // pred_check_branch
          %1017 = sbr.rel (%p1015) target = $region44
        $region43: #{tpu_custom_call.1} parent=27 // pred_region
          %1019 = vsyncadd %s1011, 0
          %s1020 = smul.addr %s20, 2
          %s1021 = scalar_lea.hbm %s2, %s1020
          %s1023 = sshll.u32 %s1014, 4
          %s1024 = int_to_ptr.vmem [resolvable:$true] %s1023
          %s1025 = sshll.u32 %s1021, 4
          %s1026 = int_to_ptr.hbm [resolvable:$true] %s1025
          %1028 = dma.vmem_to_hbm [thread:$0]  %s1024, 32, %s1026, %s1011
        $region44: #{tpu_custom_call.1} parent=27 // pred_fallthru
          _
      $region28: #{tpu_custom_call.1} parent=5 // pred_fallthru
        _
      %p1029 = scmp.le.s32.totalorder 2, %s11
      // Predicated region
      $region45: #{tpu_custom_call.1} parent=5 // pred_check
        %p1030 = pneg %p1029
      $region46: #{tpu_custom_call.1} parent=5 // pred_check_branch
        %1032 = sbr.rel (%p1030) target = $region48
      $region47: #{tpu_custom_call.1} parent=5 // pred_region
        %s1033 = ssub.s32 %s11, 2
        // Predicated region
        $region49: #{tpu_custom_call.1} parent=47 // pred_check
          %p1034 = pneg %p99
        $region50: #{tpu_custom_call.1} parent=47 // pred_check_branch
          %1036 = sbr.rel (%p1034) target = $region52
        $region51: #{tpu_custom_call.1} parent=47 // pred_region
          %s1037 = sand.u32 %s84, 1
          %s1038 = scalar_lea.sflag [#allocation4], %s1037
          %s1039 = sand.u32 %s84, 1
          %s1040 = smul.addr %s1039, 2
          %s1041 = scalar_lea.vmem [#allocation3], %s1040
          %1043 = dma.done %s1038, 32
        $region52: #{tpu_custom_call.1} parent=47 // pred_fallthru
          _
      $region48: #{tpu_custom_call.1} parent=5 // pred_fallthru
        _
    $region6: #{tpu_custom_call.1} parent=1 // loop_footer
      %s15 = sadd.s32 1, %s11
    $region7: #{tpu_custom_call.1} parent=1 // loop_footer_branch
      %10 = sbr.rel target = $region3
    $region8: #{tpu_custom_call.1} parent=1 // loop_exit
      _
    %1044 = vsyncpa [#allocation4], 1
    %s1045 = scalar_lea.sflag [#allocation4], 1
    %1046 = vsyncpa %s1045, 1

</llo_original>
